<compile_context>
chip_gen: v7x
topology: tpu7x:2x2x1
jax: 0.10.0
libtpu: 0.0.40
codegen_flags: <defaults>
</compile_context>

<pallas_src>
import functools

import jax
import jax.numpy as jnp
from jax.experimental import pallas as pl
from jax.experimental.pallas import tpu as pltpu


def hadamard_kernel(p_ref, x_ref, o_ref, *, tc):
    # p_ref: (Cpad, 1) fully-resident per-cluster scales (Cpad = grid_i * tc).
    # x_ref / o_ref: (tc, tw) lane-dense tiles.
    start = pl.multiple_of(pl.program_id(0) * tc, tc)
    scale = p_ref[pl.ds(start, tc), :]                       # (tc, 1)
    o_ref[...] = (x_ref[...] * scale).astype(o_ref.dtype)    # lane-broadcast multiply


def _min_sublane(dtype):
    # Sub-32-bit dtypes pack along sublanes: 8 rows (f32) / 16 (bf16) / 32 (int8).
    return {4: 8, 2: 16, 1: 32}.get(jnp.dtype(dtype).itemsize, 8)


def _chip_config():
    """(target_tile_bytes, vmem_limit_bytes, tensorcores_per_chip), generation-aware."""
    vmem = None
    try:
        vmem = getattr(pltpu.get_tpu_info(), "vmem_capacity_bytes", None)
    except Exception:
        vmem = None
    if vmem is not None and vmem <= (96 << 20):
        # v7x: 64 MiB VMEM per TensorCore, 2 TensorCores/chip.
        # 8 MiB tiles -> ~32 MiB of double-buffered in+out, under a 44 MiB limit.
        return 8 << 20, 44 << 20, 2
    if vmem is not None:
        # v5e / v6e: 128 MiB VMEM, single TensorCore. Big tiles, no forced grid split.
        return 16 << 20, 64 << 20, 1
    # Unknown chip: conservative, known-good defaults; assume megacore is possible.
    return 4 << 20, 32 << 20, 2


def _pick_width_tile(W, itemsize, target_tile_bytes, min_sub):
    """Full width if a minimal-sublane tile fits the budget (or W <= 128); otherwise
    the largest 128-lane multiple under the budget. cdiv grid masks any ragged edge."""
    if W <= 128 or min_sub * W * itemsize <= target_tile_bytes:
        return W
    max_lanes = max(128, (target_tile_bytes // (min_sub * itemsize)) // 128 * 128)
    return min(max_lanes, max(128, (W // 128) * 128))


def _pick_cluster_tile(num_clusters, tw, itemsize, target_tile_bytes, min_sub):
    """Largest sublane-packed tc with a (tc, tw) tile under the budget; capped at the
    full cluster axis. No divisibility requirement (cdiv grid masks the edge)."""
    rows = target_tile_bytes // (tw * itemsize)
    tc = max(min_sub, (rows // min_sub) * min_sub)
    return num_clusters if tc >= num_clusters else tc


def _megacore_adjust(num_clusters, tc, W, tw, min_sub, num_cores):
    """On multi-TensorCore chips (v7x), make at least one 'parallel' grid axis have an
    even (>= 2) step count so both cores get equal work. No-op on single-TC chips."""
    if num_cores < 2:
        return tc, tw

    def _even(n):
        return n >= 2 and n % 2 == 0

    gi, gj = pl.cdiv(num_clusters, tc), pl.cdiv(W, tw)
    if _even(gi) or _even(gj):
        return tc, tw
    # Prefer re-balancing the cluster axis (keeps tiles lane-dense).
    tgt = 2 * pl.cdiv(gi, 2) if gi > 1 else 2
    new_tc = min(tc, ((pl.cdiv(num_clusters, tgt) + min_sub - 1) // min_sub) * min_sub)
    if new_tc >= min_sub and _even(pl.cdiv(num_clusters, new_tc)):
        return new_tc, tw
    # Otherwise split the width axis on a 128-lane boundary.
    if tw >= 256:
        tgt = 2 * pl.cdiv(gj, 2) if gj > 1 else 2
        new_tw = min(tw, ((pl.cdiv(W, tgt) + 127) // 128) * 128)
        if _even(pl.cdiv(W, new_tw)):
            return tc, new_tw
    return tc, tw


def hadamard_repara(x, p, response_dim, *, donate_x=False, target_tile_bytes=None):
    """x: (M, D) with M = num_clusters * response_dim; p: (num_clusters, 1)."""
    M, D = x.shape
    num_clusters = p.shape[0]
    assert p.shape == (num_clusters, 1)
    assert M == num_clusters * response_dim

    # Match PyTorch type promotion (e.g. bf16 x, f32 p -> f32 output).
    out_dtype = jnp.result_type(x.dtype, p.dtype)

    W = response_dim * D
    # Row-major contiguous reshape: the response_dim rows of each cluster become one
    # long lane-dense row. Metadata-only, no data movement.
    xr = x.reshape(num_clusters, W)

    chip_tile, vmem_limit, num_cores = _chip_config()
    if target_tile_bytes is None:
        target_tile_bytes = chip_tile

    itemsize = jnp.dtype(x.dtype).itemsize
    min_sub = _min_sublane(x.dtype)
    tw = _pick_width_tile(W, itemsize, target_tile_bytes, min_sub)
    tc = _pick_cluster_tile(num_clusters, tw, itemsize, target_tile_bytes, min_sub)
    tc, tw = _megacore_adjust(num_clusters, tc, W, tw, min_sub, num_cores)

    gi, gj = pl.cdiv(num_clusters, tc), pl.cdiv(W, tw)

    # Keep p fully VMEM-resident (one tiny block, DMA'd once); pad its rows so the
    # in-kernel dynamic slice on the (possibly ragged) last grid step never runs OOB.
    cpad = gi * tc
    p_full = jnp.pad(p, ((0, cpad - num_clusters), (0, 0))) if cpad != num_clusters else p

    # In-place scale in HBM when the caller can donate x and dtypes line up.
    aliases = {1: 0} if (donate_x and out_dtype == x.dtype) else {}

    out = pl.pallas_call(
        functools.partial(hadamard_kernel, tc=tc),
        out_shape=jax.ShapeDtypeStruct((num_clusters, W), out_dtype),
        grid_spec=pltpu.PrefetchScalarGridSpec(
            num_scalar_prefetch=0,
            grid=(gi, gj),  # width axis last: output writeback stays lane-sequential
            in_specs=[
                pl.BlockSpec((cpad, 1), lambda i, j: (0, 0)),   # p, fully resident
                pl.BlockSpec((tc, tw), lambda i, j: (i, j)),    # x tile
            ],
            out_specs=pl.BlockSpec((tc, tw), lambda i, j: (i, j)),
        ),
        compiler_params=pltpu.CompilerParams(
            dimension_semantics=("parallel", "parallel"),
            vmem_limit_bytes=vmem_limit,
        ),
        input_output_aliases=aliases,
    )(p_full, xr)

    return out.reshape(M, D)


def _reference(x, p, response_dim):
    # jnp broadcasting uses the same type-promotion rules as the kernel.
    return x * jnp.repeat(p, response_dim, axis=0)


def _check(x, p, response_dim, **kw):
    out = jax.block_until_ready(hadamard_repara(x, p, response_dim, **kw))
    ref = _reference(x, p, response_dim)
    assert out.shape == x.shape
    assert out.dtype == ref.dtype, (out.dtype, ref.dtype)
    assert jnp.allclose(out.astype(jnp.float32), ref.astype(jnp.float32),
                        atol=1e-5, rtol=1e-5)


if __name__ == "__main__":
    key = jax.random.PRNGKey(0)
    k1, k2, k3, k4, k5, k6, k7, k8 = jax.random.split(key, 8)

    # Case 1: shape implied by the module (num_clusters=4, response_dim=8, D=128).
    nc, rd, D = 4, 8, 128
    x = jax.random.normal(k1, (nc * rd, D), dtype=jnp.float32)
    p = 1.0 + 0.1 * jax.random.normal(k2, (nc, 1), dtype=jnp.float32)
    _check(x, p, rd)

    # Case 2: multi-cluster shape.
    nc, rd, D = 16, 4, 256
    x = jax.random.normal(k3, (nc * rd, D), dtype=jnp.float32)
    p = 1.0 + 0.1 * jax.random.normal(k4, (nc, 1), dtype=jnp.float32)
    _check(x, p, rd)

    # Case 3: ragged cdiv grid on the cluster axis (20 clusters, W=288 not a 128-mult),
    # forced small tile budget to exercise edge-block masking + in-kernel p slicing.
    nc, rd, D = 20, 3, 96
    x = jax.random.normal(k5, (nc * rd, D), dtype=jnp.float32)
    p = 1.0 + 0.1 * jax.random.normal(k6, (nc, 1), dtype=jnp.float32)
    _check(x, p, rd, target_tile_bytes=16 << 10)

    # Case 4: ragged grid on both axes + mixed dtypes (bf16 x, f32 p -> f32 out,
    # matching PyTorch type promotion).
    nc, rd, D = 12, 2, 512
    x = jax.random.normal(k7, (nc * rd, D), dtype=jnp.bfloat16)
    p = 1.0 + 0.1 * jax.random.normal(k8, (nc, 1), dtype=jnp.float32)
    _check(x, p, rd, target_tile_bytes=16 << 10)

    print("KERNEL_OK")
</pallas_src>

<mosaic_0001>
module attributes {stable_mosaic.version = 11 : i64} {
  func.func @hadamard_kernel(%arg0: i32, %arg1: i32, %arg2: memref<4x1xf32, #tpu.memory_space<vmem>>, %arg3: memref<4x512xf32, #tpu.memory_space<vmem>>, %arg4: memref<4x512xf32, #tpu.memory_space<vmem>>) attributes {dimension_semantics = [#tpu.dimension_semantics<parallel>, #tpu.dimension_semantics<parallel>], iteration_bounds = array<i64: 1, 2>, scalar_prefetch = 0 : i64, scratch_operands = 0 : i64, tpu.core_type = #tpu.core_type<tc>, window_params = [{pipeline_mode = #tpu.pipeline_mode<synchronous>, transform_indices = @transform_0, window_bounds = array<i64: 4, 1>}, {transform_indices = @transform_1, window_bounds = array<i64: 4, 512>}, {transform_indices = @transform_2, window_bounds = array<i64: 4, 512>}]} {
    %c4_i32 = arith.constant 4 : i32
    %0 = arith.muli %arg0, %c4_i32 : i32
    %1 = tpu.assume_multiple %0, 4 : i32
    %2 = arith.index_cast %1 : i32 to index
    %c0 = arith.constant 0 : index
    %3 = vector.load %arg2[%2, %c0] : memref<4x1xf32, #tpu.memory_space<vmem>>, vector<4x1xf32>
    %c0_0 = arith.constant 0 : index
    %c0_1 = arith.constant 0 : index
    %4 = vector.load %arg3[%c0_0, %c0_1] : memref<4x512xf32, #tpu.memory_space<vmem>>, vector<4x512xf32>
    %5 = vector.broadcast %3 : vector<4x1xf32> to vector<4x512xf32>
    %6 = arith.mulf %4, %5 : vector<4x512xf32>
    %c0_2 = arith.constant 0 : index
    %c0_3 = arith.constant 0 : index
    %7 = vector.load %arg4[%c0_2, %c0_3] : memref<4x512xf32, #tpu.memory_space<vmem>>, vector<4x512xf32>
    tpu.vector_store %arg4[%c0_2, %c0_3], %6 {strides = array<i32>} : memref<4x512xf32, #tpu.memory_space<vmem>>, vector<4x512xf32>,
    return
  }
  func.func @transform_0(%arg0: i32, %arg1: i32) -> (i32, i32) {
    %c0_i32 = arith.constant 0 : i32
    %c0_i32_0 = arith.constant 0 : i32
    %c0_i32_1 = arith.constant 0 : i32
    return %c0_i32, %c0_i32_0 : i32, i32
  }
  func.func @transform_1(%arg0: i32, %arg1: i32) -> (i32, i32) {
    %c0_i32 = arith.constant 0 : i32
    return %arg0, %arg1 : i32, i32
  }
  func.func @transform_2(%arg0: i32, %arg1: i32) -> (i32, i32) {
    %c0_i32 = arith.constant 0 : i32
    return %arg0, %arg1 : i32, i32
  }
}

</mosaic_0001>

<llo_original>
// kernel: tpu_custom_call.1
$region0: #{tpu_custom_call.1}
  #allocation0 [shape = 'u32[]', space=smem, size = 0x4, offset = 0x4, fixed_abs, tag = 'smem constant byte address 0x4 - core index']
  #allocation1 [shape = 'u32[144,128]{1,0:T(1,128)}', space=vmem, size = 0x12000, scoped, tag = 'internal scratch']
  %s0 = inlined_call_operand.vmem [shape: f32[4,1], index: 0, kind: input, shape index: {}]
  %s1 = inlined_call_operand.hbm [shape: f32[4,1024], index: 1, kind: input, shape index: {}]
  %s2 = inlined_call_operand.hbm [shape: f32[4,1024], index: 2, kind: output, shape index: {}]
  %s3 = sld [smem:[#allocation0]]
  $region45: #{tpu_custom_call.1} parent=0
    _
  %s5 = ssub.s32 1, %s3
  %s6 = scalar_select 0, %s5, %s3
  $region1: #{tpu_custom_call.1} parent=0
    #allocation2 [shape = 'u8[16384]{0}', space=vmem, size = 0x4000, scoped, tag = 'input window, operand 1']
    #allocation3 [shape = 's32[2]{0}', space=sflag, size = 0x8, scoped, tag = 'scoped memory for tpu_custom_call.1']
    #allocation4 [shape = 's32[2]{0}', space=sflag, size = 0x8, scoped, tag = 'scoped memory for tpu_custom_call.1']
    #allocation5 [shape = 'u8[16384]{0}', space=vmem, size = 0x4000, scoped, tag = 'output window, operand 0']
    %7 = vsyncpa [#allocation3], 0
    %s8 = scalar_lea.sflag [#allocation3], 1
    %9 = vsyncpa %s8, 0
    %10 = vsyncpa [#allocation4], 0
    %s11 = scalar_lea.sflag [#allocation4], 1
    %12 = vsyncpa %s11, 0
    loop: start=0, step=1, limit=4
    $region2: #{tpu_custom_call.1} parent=1 // loop_pre_header
      _
    $region3: #{tpu_custom_call.1} parent=1 // loop_header
      %s14 = sphi 0, %s18
      %p15 = scmp.ge.s32.totalorder %s14, 4
      %s21 = sphi 0, %s33
      %s22 = sphi 0, %s29
      %s23 = sphi 0, %s21
      %s24 = sphi 0, %s22
      %s25 = sphi 0, %s23
      %s26 = sphi 0, %s24
      %s34 = sphi 0, %s34
      %s36 = sphi 0, %s34
      %s37 = sphi 0, %s36
      %s51 = sphi 0, %s37
      %s59 = sphi 0, %s61
      %s62 = sphi 0, %s59
      %s63 = sphi 0, %s62
      %s79 = sphi 0, %s63
      %s87 = sphi 0, %s89
      %s90 = sphi 0, %s87
      %s91 = sphi 0, %s90
      %s107 = sphi 0, %s91
    $region4: #{tpu_custom_call.1} parent=1 // loop_header_branch
      %17 = sbr.rel (%p15) target = $region8
    $region5: #{tpu_custom_call.1} parent=1 // loop_body
      %s19 = ssub.s32 %s14, 1
      %s20 = ssub.s32 %s14, 2
      %s27 = sadd.s32 1, %s22
      %p28 = scmp.ge.s32.totalorder %s27, 2
      %s29 = scalar_select %p28, 0, %s27
      %s30 = sadd.s32 1, %s21
      %s31 = scalar_select %p28, %s30, %s21
      %p32 = scmp.ge.s32.totalorder %s31, 1
      %s33 = scalar_select %p32, 0, %s31
      %s35 = sadd.s32 %s34, 1
      %p38 = scmp.eq.s32.totalorder %s14, 1
      %p39 = scmp.ne.s32.totalorder %s34, %s36
      %p40 = scmp.eq.s32.totalorder %s14, 0
      %p41 = por %p39, %p40
      %p42 = scmp.ne.s32.totalorder %s34, %s36
      %p43 = scmp.eq.s32.totalorder %s19, 1
      %p44 = por %p42, %p43
      %p45 = scmp.ne.s32.totalorder %s36, %s37
      %p46 = scmp.eq.s32.totalorder %s19, 0
      %p47 = por %p45, %p46
      %p48 = scmp.ne.s32.totalorder %s36, %s37
      %p49 = scmp.eq.s32.totalorder %s20, 1
      %p50 = por %p48, %p49
      %p52 = scmp.ne.s32.totalorder %s37, %s51
      %p53 = scmp.eq.s32.totalorder %s20, 0
      %p54 = por %p52, %p53
      %s55 = ssub.s32 %s21, %s33
      %s56 = ssub.s32 %s22, %s29
      %s57 = sor.u32 %s55, %s56
      %p58 = scmp.eq.s32.totalorder %s57, 0
      %s60 = sadd.s32 %s59, 1
      %s61 = scalar_select %p58, %s59, %s60
      %p64 = pneg %p58
      %p65 = scmp.eq.s32.totalorder %s14, 1
      %p66 = por %p64, %p65
      %p67 = scmp.ne.s32.totalorder %s59, %s62
      %p68 = scmp.eq.s32.totalorder %s14, 0
      %p69 = por %p67, %p68
      %p70 = scmp.ne.s32.totalorder %s59, %s62
      %p71 = scmp.eq.s32.totalorder %s19, 1
      %p72 = por %p70, %p71
      %p73 = scmp.ne.s32.totalorder %s62, %s63
      %p74 = scmp.eq.s32.totalorder %s19, 0
      %p75 = por %p73, %p74
      %p76 = scmp.ne.s32.totalorder %s62, %s63
      %p77 = scmp.eq.s32.totalorder %s20, 1
      %p78 = por %p76, %p77
      %p80 = scmp.ne.s32.totalorder %s63, %s79
      %p81 = scmp.eq.s32.totalorder %s20, 0
      %p82 = por %p80, %p81
      %s83 = ssub.s32 %s21, %s33
      %s84 = ssub.s32 %s22, %s29
      %s85 = sor.u32 %s83, %s84
      %p86 = scmp.eq.s32.totalorder %s85, 0
      %s88 = sadd.s32 %s87, 1
      %s89 = scalar_select %p86, %s87, %s88
      %p92 = pneg %p86
      %p93 = scmp.eq.s32.totalorder %s14, 1
      %p94 = por %p92, %p93
      %p95 = scmp.ne.s32.totalorder %s87, %s90
      %p96 = scmp.eq.s32.totalorder %s14, 0
      %p97 = por %p95, %p96
      %p98 = scmp.ne.s32.totalorder %s87, %s90
      %p99 = scmp.eq.s32.totalorder %s19, 1
      %p100 = por %p98, %p99
      %p101 = scmp.ne.s32.totalorder %s90, %s91
      %p102 = scmp.eq.s32.totalorder %s19, 0
      %p103 = por %p101, %p102
      %p104 = scmp.ne.s32.totalorder %s90, %s91
      %p105 = scmp.eq.s32.totalorder %s20, 1
      %p106 = por %p104, %p105
      %p108 = scmp.ne.s32.totalorder %s91, %s107
      %p109 = scmp.eq.s32.totalorder %s20, 0
      %p110 = por %p108, %p109
      %p111 = scmp.le.s32.totalorder 1, %s14
      %p112 = scmp.lt.s32.totalorder %s14, 3
      %p113 = pnand %p111, %p112
      %p114 = pneg %p113
      // Predicated region
      $region9: #{tpu_custom_call.1} parent=5 // pred_check
        _
      $region10: #{tpu_custom_call.1} parent=5 // pred_check_branch
        %116 = sbr.rel (%p113) target = $region12
      $region11: #{tpu_custom_call.1} parent=5 // pred_region
        %s117 = ssub.s32 %s14, 1
        // Predicated region
        $region13: #{tpu_custom_call.1} parent=11 // pred_check
          %p118 = pneg %p47
        $region14: #{tpu_custom_call.1} parent=11 // pred_check_branch
          %120 = sbr.rel (%p118) target = $region16
        $region15: #{tpu_custom_call.1} parent=11 // pred_region
          _
        $region16: #{tpu_custom_call.1} parent=11 // pred_fallthru
          _
      $region12: #{tpu_custom_call.1} parent=5 // pred_fallthru
        _
      %p121 = scmp.lt.s32.totalorder %s14, 2
      // Predicated region
      $region17: #{tpu_custom_call.1} parent=5 // pred_check
        %p122 = pneg %p121
      $region18: #{tpu_custom_call.1} parent=5 // pred_check_branch
        %124 = sbr.rel (%p122) target = $region20
      $region19: #{tpu_custom_call.1} parent=5 // pred_region
        // Predicated region
        $region21: #{tpu_custom_call.1} parent=19 // pred_check
          %p125 = pneg %p69
        $region22: #{tpu_custom_call.1} parent=19 // pred_check_branch
          %127 = sbr.rel (%p125) target = $region24
        $region23: #{tpu_custom_call.1} parent=19 // pred_region
          %s128 = sand.u32 %s59, 1
          %s129 = scalar_lea.sflag [#allocation3], %s128
          %s130 = sand.u32 %s59, 1
          %s131 = smul.addr %s130, 16
          %s132 = scalar_lea.vmem [#allocation2], %s131
          %s133 = smul.u32 4, %s22
          %s135 = ssub.s32 256, 256
          %136 = vsyncadd %s129, %s135
          %s137 = smul.addr %s21, 8
          %s138 = sadd.s32 %s133, %s137
          %s139 = smul.addr %s138, 64
          %s140 = scalar_lea.hbm %s1, %s139
          %s142 = sshll.u32 %s132, 4
          %s143 = int_to_ptr.vmem [resolvable:$true] %s142
          %145 = dma.hbm_to_vmem [thread:$0]  %s140, 256, %s143, %s129
        $region24: #{tpu_custom_call.1} parent=19 // pred_fallthru
          _
      $region20: #{tpu_custom_call.1} parent=5 // pred_fallthru
        _
      %p146 = scmp.le.s32.totalorder 1, %s14
      %p147 = scmp.lt.s32.totalorder %s14, 3
      %p148 = pnand %p146, %p147
      %p149 = pneg %p148
      // Predicated region
      $region25: #{tpu_custom_call.1} parent=5 // pred_check
        _
      $region26: #{tpu_custom_call.1} parent=5 // pred_check_branch
        %151 = sbr.rel (%p148) target = $region28
      $region27: #{tpu_custom_call.1} parent=5 // pred_region
        %s152 = ssub.s32 %s14, 1
        %s153 = sand.u32 %s62, 1
        %s154 = scalar_lea.sflag [#allocation3], %s153
        %s155 = sand.u32 %s62, 1
        %s156 = smul.addr %s155, 16
        %s157 = scalar_lea.vmem [#allocation2], %s156
        // Predicated region
        $region29: #{tpu_custom_call.1} parent=27 // pred_check
          %p158 = pneg %p75
        $region30: #{tpu_custom_call.1} parent=27 // pred_check_branch
          %160 = sbr.rel (%p158) target = $region32
        $region31: #{tpu_custom_call.1} parent=27 // pred_region
          %161 = dma.done %s154, 256
        $region32: #{tpu_custom_call.1} parent=27 // pred_fallthru
          _
        %p162 = pneg %p47
        %p163 = pneg %p44
        %s164 = sand.u32 %s62, 1
        %s165 = scalar_lea.sflag [#allocation3], %s164
        %s166 = sand.u32 %s62, 1
        %s167 = smul.addr %s166, 16
        %s168 = scalar_lea.vmem [#allocation2], %s167
        %p169 = pneg %p75
        %p170 = pneg %p72
        %p171 = pneg %p103
        %p172 = pneg %p100
        %s173 = sand.u32 %s90, 1
        %s174 = scalar_lea.sflag [#allocation4], %s173
        %s175 = sand.u32 %s90, 1
        %s176 = smul.addr %s175, 16
        %s177 = scalar_lea.vmem [#allocation5], %s176
        %s178 = smul.u32 4, %s24
        %s179 = smul.u32 4, %s24
        %s180 = smul.u32 %s23, 4
        %s181 = scalar_lea.vmem %s0, %s180
        %v182 = vld [vmem:[%s181] sm:$0xf]
        %v183 = vld [vmem:[%s157] sm:$0xff]
        %v184 = vld [vmem:[%s157 + $0x8] sm:$0xff]
        %186 = vset.pattern.permute.xlu0 0
        %187 = vperm.xlu0 %186, %v182
        %v188 = vpop.permute.xlu0 %187
        %v190 = vunpack.c.l.s4 839922192
        %v191 = vunpack.c.0.s8 %v190
        %v192 = vlaneseq
        %v193 = vshrl.u32 %v192, 7
        %v194 = vsub.s32 %v191, %v193
        %v195 = vrot.slane %v188, %v194
        %v197 = vmul.f32 %v183, %v195
        %v198 = vmul.f32 %v184, %v195
        %199 = vst [vmem:[%s177] sm:$0xff] %v197
        %200 = vst [vmem:[%s177 + $0x8] sm:$0xff] %v198
        %s201 = sand.u32 %s90, 1
        %s202 = scalar_lea.sflag [#allocation4], %s201
        %s203 = sand.u32 %s90, 1
        %s204 = smul.addr %s203, 16
        %s205 = scalar_lea.vmem [#allocation5], %s204
        // Predicated region
        $region33: #{tpu_custom_call.1} parent=27 // pred_check
          %p206 = pneg %p100
        $region34: #{tpu_custom_call.1} parent=27 // pred_check_branch
          %208 = sbr.rel (%p206) target = $region36
        $region35: #{tpu_custom_call.1} parent=27 // pred_region
          %s209 = smul.u32 4, %s24
          %s211 = ssub.s32 256, 256
          %212 = vsyncadd %s202, %s211
          %s213 = smul.addr %s23, 8
          %s214 = sadd.s32 %s209, %s213
          %s215 = smul.addr %s214, 64
          %s216 = scalar_lea.hbm %s2, %s215
          %s218 = sshll.u32 %s205, 4
          %s219 = int_to_ptr.vmem [resolvable:$true] %s218
          %221 = dma.vmem_to_hbm [thread:$0]  %s219, 256, %s216, %s202
        $region36: #{tpu_custom_call.1} parent=27 // pred_fallthru
          _
      $region28: #{tpu_custom_call.1} parent=5 // pred_fallthru
        _
      %p222 = scmp.le.s32.totalorder 2, %s14
      // Predicated region
      $region37: #{tpu_custom_call.1} parent=5 // pred_check
        %p223 = pneg %p222
      $region38: #{tpu_custom_call.1} parent=5 // pred_check_branch
        %225 = sbr.rel (%p223) target = $region40
      $region39: #{tpu_custom_call.1} parent=5 // pred_region
        %s226 = ssub.s32 %s14, 2
        // Predicated region
        $region41: #{tpu_custom_call.1} parent=39 // pred_check
          %p227 = pneg %p106
        $region42: #{tpu_custom_call.1} parent=39 // pred_check_branch
          %229 = sbr.rel (%p227) target = $region44
        $region43: #{tpu_custom_call.1} parent=39 // pred_region
          %s230 = sand.u32 %s91, 1
          %s231 = scalar_lea.sflag [#allocation4], %s230
          %s232 = sand.u32 %s91, 1
          %s233 = smul.addr %s232, 16
          %s234 = scalar_lea.vmem [#allocation5], %s233
          %235 = dma.done %s231, 256
        $region44: #{tpu_custom_call.1} parent=39 // pred_fallthru
          _
      $region40: #{tpu_custom_call.1} parent=5 // pred_fallthru
        _
    $region6: #{tpu_custom_call.1} parent=1 // loop_footer
      %s18 = sadd.s32 1, %s14
    $region7: #{tpu_custom_call.1} parent=1 // loop_footer_branch
      %13 = sbr.rel target = $region3
    $region8: #{tpu_custom_call.1} parent=1 // loop_exit
      _
    %236 = vsyncpa [#allocation3], 1
    %s237 = scalar_lea.sflag [#allocation3], 1
    %238 = vsyncpa %s237, 1
    %239 = vsyncpa [#allocation4], 1
    %s240 = scalar_lea.sflag [#allocation4], 1
    %241 = vsyncpa %s240, 1

</llo_original>
